<compile_context>
chip_gen: v7x
topology: tpu7x:2x2x1
jax: 0.10.0
libtpu: 0.0.40
codegen_flags: <defaults>
</compile_context>

<pallas_src>
import jax
import jax.numpy as jnp
from jax.experimental import pallas as pl
from jax.experimental.pallas import tpu as pltpu

HIDDEN = 768                 # fixed by the module definition (Linear(768, 1))
LANES = 128                  # TPU lane width
N_CHUNKS = HIDDEN // LANES   # 6 column chunks of 128 lanes


def _round_up(x, m):
    return ((x + m - 1) // m) * m


def _chip_config():
    """Per-generation batch tile / scoped-VMEM budget (conservative defaults)."""
    kind = ""
    try:
        kind = jax.devices()[0].device_kind.lower()
    except Exception:
        pass
    if "v7" in kind or "7x" in kind:
        # ~3.2 TB/s per-TC HBM: a 12 MiB tile DMA ~4us, so the ~0.35us per-step
        # overhead drops below 10%.  2 x 12 MiB double-buffered activations +
        # temporaries stay well under the 64 MiB physical VMEM; the 32 MiB
        # default scoped limit must be raised explicitly.  min_tiles=2 keeps
        # both TensorCores streaming for medium batches.
        return dict(tb=4096, vmem_limit=56 << 20, min_tiles=2)
    if "v6" in kind:
        return dict(tb=4096, vmem_limit=64 << 20, min_tiles=1)
    # v5e or unknown: default scoped VMEM is only 16 MiB -> raise it so the
    # 2 x 6 MiB double-buffered tiles (+ temporaries) cannot hit the wall.
    return dict(tb=2048, vmem_limit=48 << 20, min_tiles=1)


def bert_head_kernel(x_ref, w_ref, b_ref, o_ref):
    # x_ref: (TB, 768)  f32/bf16  activation tile, VMEM (auto-pipelined)
    # w_ref: (1, 768)   f32       lane-dense torch-layout weight, VMEM (resident)
    # b_ref: (1,)       f32       linear bias, SMEM (scalar read)
    # o_ref: (1, TB//128, 128) f32  lane-dense sigmoid(logits) slab, VMEM
    tb = x_ref.shape[0]
    groups = tb // LANES

    # --- matvec: accumulate elementwise products over 128-lane column chunks
    # so no (TB, 768) f32 temporary is materialized in VMEM, then one lane
    # reduce (XLU slot, idle under the DMA-bound loop).
    acc = x_ref[:, 0:LANES].astype(jnp.float32) * w_ref[:, 0:LANES].astype(jnp.float32)
    for c in range(1, N_CHUNKS):
        sl = slice(c * LANES, (c + 1) * LANES)
        acc = acc + x_ref[:, sl].astype(jnp.float32) * w_ref[:, sl].astype(jnp.float32)
    logits = jnp.sum(acc, axis=-1, keepdims=True) + b_ref[0]     # (TB, 1)
    probs = jax.nn.sigmoid(logits)                               # EUP slot (free)

    # --- sublane -> lane relayout into the lane-dense output slab using only
    # natively supported ops: scatter each row's value onto lane (row & 127)
    # via an iota mask, then sublane-reduce every group of 128 rows.
    row = jax.lax.broadcasted_iota(jnp.int32, (tb, LANES), 0)
    lane = jax.lax.broadcasted_iota(jnp.int32, (tb, LANES), 1)
    scattered = jnp.where((row & (LANES - 1)) == lane, probs, 0.0)       # (TB, 128)
    out_lane = jnp.sum(scattered.reshape(groups, LANES, LANES), axis=1)  # (TB//128, 128)
    o_ref[0] = out_lane                                # unmasked lane-dense store


def bert_class_forward(inputs, params, *, tb=None):
    """Effective forward of BERTClass: sigmoid(inputs @ linear.weight.T + bias).

    pre_classifier2 / pre_classifier / dropout are dead code in the original
    forward (each result immediately overwritten), so only the 768->1 head
    runs.  `inputs` may be float32 or bfloat16 (bf16 halves HBM traffic on
    this purely read-bound kernel); the kernel upcasts to f32 internally.
    """
    # TODO(synk): the real >=2x win is fusing this head into the kernel that
    # produces `inputs` (pooler / last encoder layer) so the (B, 768)
    # activations never round-trip HBM; standalone it already sits at the
    # HBM-read roofline.
    B, H = inputs.shape
    assert H == HIDDEN

    cfg = _chip_config()
    tb_target = tb if tb is not None else cfg["tb"]

    # Lane-dense output => pad the batch to a multiple of 128 rows.  Padded
    # rows only compute sigmoid(bias) and are sliced off below.
    b128 = _round_up(B, LANES)
    n_tiles = max(pl.cdiv(b128, tb_target), 1)
    # Guarantee >= min_tiles grid steps so ("parallel",) actually shards the
    # batch across both v7x TensorCores (each streams half the HBM traffic).
    if n_tiles < cfg["min_tiles"] and b128 >= cfg["min_tiles"] * LANES:
        n_tiles = cfg["min_tiles"]
    tb_eff = _round_up(pl.cdiv(b128, n_tiles), LANES)
    b_pad = n_tiles * tb_eff
    groups = tb_eff // LANES

    x = inputs if b_pad == B else jnp.pad(inputs, ((0, b_pad - B), (0, 0)))
    w = params["linear_w"].astype(jnp.float32)   # (1, 768) torch layout, lane-dense
    b = params["linear_b"].astype(jnp.float32)   # (1,)

    out = pl.pallas_call(
        bert_head_kernel,
        out_shape=jax.ShapeDtypeStruct((n_tiles, groups, LANES), jnp.float32),
        grid=(n_tiles,),
        in_specs=[
            pl.BlockSpec((tb_eff, HIDDEN), lambda i: (i, 0)),        # activations
            pl.BlockSpec((1, HIDDEN), lambda i: (0, 0)),             # weight (resident)
            pl.BlockSpec(memory_space=pltpu.MemorySpace.SMEM),       # bias scalar
        ],
        out_specs=pl.BlockSpec((1, groups, LANES), lambda i: (i, 0, 0)),
        compiler_params=pltpu.CompilerParams(
            dimension_semantics=("parallel",),      # megacore sharding on v7x
            vmem_limit_bytes=cfg["vmem_limit"],
        ),
        cost_estimate=pl.CostEstimate(
            flops=2 * b_pad * HIDDEN,
            transcendentals=b_pad,
            bytes_accessed=b_pad * HIDDEN * x.dtype.itemsize + HIDDEN * 4 + b_pad * 4,
        ),
    )(x, w, b)

    # (n_tiles, TB//128, 128) in row-major order == global batch order.
    return out.reshape(-1)[:B].reshape(B, 1)


def init_params(key):
    """Deterministic parameter init mirroring the module's __init__ shapes."""
    k1, k2, k3, k4, k5, k6 = jax.random.split(key, 6)

    def torch_linear_init(kw, kb, fan_in, shape_w, shape_b):
        # PyTorch default Linear init: U(-1/sqrt(fan_in), 1/sqrt(fan_in))
        bound = 1.0 / jnp.sqrt(jnp.float32(fan_in))
        w = jax.random.uniform(kw, shape_w, jnp.float32, -bound, bound)
        b = jax.random.uniform(kb, shape_b, jnp.float32, -bound, bound)
        return w, b

    # Dead layers (outputs overwritten in forward) — kept only for shape
    # fidelity with the original module; never computed.
    pc2_w, pc2_b = torch_linear_init(k1, k2, HIDDEN, (HIDDEN, HIDDEN), (HIDDEN,))
    pc_w, pc_b = torch_linear_init(k3, k4, HIDDEN, (HIDDEN, HIDDEN), (HIDDEN,))

    # linear: Linear(768, 1) with xavier_uniform on the weight.
    xavier_bound = jnp.sqrt(6.0 / (HIDDEN + 1))
    lin_w = jax.random.uniform(k5, (1, HIDDEN), jnp.float32, -xavier_bound, xavier_bound)
    lin_b = jax.random.uniform(
        k6, (1,), jnp.float32,
        -1.0 / jnp.sqrt(jnp.float32(HIDDEN)), 1.0 / jnp.sqrt(jnp.float32(HIDDEN)),
    )

    return {
        "pre_classifier2_w": pc2_w,
        "pre_classifier2_b": pc2_b,
        "pre_classifier_w": pc_w,
        "pre_classifier_b": pc_b,
        "linear_w": lin_w,   # (1, 768) torch layout (out_features, in_features)
        "linear_b": lin_b,   # (1,)
    }


if __name__ == "__main__":
    key = jax.random.PRNGKey(0)
    k_params, k_x1, k_x2 = jax.random.split(key, 3)
    params = init_params(k_params)

    def ref_forward(x):
        return jax.nn.sigmoid(x @ params["linear_w"].T + params["linear_b"])

    # Small batch (single tile; internally padded to 128 lane-dense rows).
    B1 = 8
    x1 = jax.random.normal(k_x1, (B1, HIDDEN), jnp.float32)
    out1 = jax.block_until_ready(bert_class_forward(x1, params))
    assert out1.shape == (B1, 1)
    assert jnp.allclose(out1, ref_forward(x1), atol=1e-4, rtol=1e-4)

    # Multi-tile + padding path (grid >= 2, tail rows sliced off).
    B2 = 272
    x2 = jax.random.normal(k_x2, (B2, HIDDEN), jnp.float32)
    out2 = jax.block_until_ready(bert_class_forward(x2, params, tb=128))
    assert out2.shape == (B2, 1)
    assert jnp.allclose(out2, ref_forward(x2), atol=1e-4, rtol=1e-4)

    print("KERNEL_OK")
</pallas_src>

<mosaic_0001>
module attributes {stable_mosaic.version = 11 : i64} {
  func.func @bert_head_kernel(%arg0: i32, %arg1: memref<128x768xf32, #tpu.memory_space<vmem>>, %arg2: memref<1x768xf32, #tpu.memory_space<vmem>>, %arg3: memref<1xf32, #tpu.memory_space<smem>>, %arg4: memref<1x1x128xf32, #tpu.memory_space<vmem>>) attributes {dimension_semantics = [#tpu.dimension_semantics<parallel>], iteration_bounds = array<i64: 1>, scalar_prefetch = 0 : i64, scratch_operands = 0 : i64, tpu.core_type = #tpu.core_type<tc>, window_params = [{transform_indices = @transform_0, window_bounds = array<i64: 128, 768>}, {pipeline_mode = #tpu.pipeline_mode<synchronous>, transform_indices = @transform_1, window_bounds = array<i64: 1, 768>}, {transform_indices = @transform_2, window_bounds = array<i64: 1>}, {transform_indices = @transform_3, window_bounds = array<i64: 1, 1, 128>}]} {
    %c0 = arith.constant 0 : index
    %c0_0 = arith.constant 0 : index
    %0 = vector.load %arg1[%c0, %c0_0] : memref<128x768xf32, #tpu.memory_space<vmem>>, vector<128x128xf32>
    %c0_1 = arith.constant 0 : index
    %c0_2 = arith.constant 0 : index
    %1 = vector.load %arg2[%c0_1, %c0_2] : memref<1x768xf32, #tpu.memory_space<vmem>>, vector<1x128xf32>
    %2 = vector.broadcast %1 : vector<1x128xf32> to vector<128x128xf32>
    %3 = arith.mulf %0, %2 : vector<128x128xf32>
    %c0_3 = arith.constant 0 : index
    %c128 = arith.constant 128 : index
    %4 = vector.load %arg1[%c0_3, %c128] : memref<128x768xf32, #tpu.memory_space<vmem>>, vector<128x128xf32>
    %c0_4 = arith.constant 0 : index
    %c128_5 = arith.constant 128 : index
    %5 = vector.load %arg2[%c0_4, %c128_5] : memref<1x768xf32, #tpu.memory_space<vmem>>, vector<1x128xf32>
    %6 = vector.broadcast %5 : vector<1x128xf32> to vector<128x128xf32>
    %7 = arith.mulf %4, %6 : vector<128x128xf32>
    %8 = arith.addf %3, %7 : vector<128x128xf32>
    %c0_6 = arith.constant 0 : index
    %c256 = arith.constant 256 : index
    %9 = vector.load %arg1[%c0_6, %c256] : memref<128x768xf32, #tpu.memory_space<vmem>>, vector<128x128xf32>
    %c0_7 = arith.constant 0 : index
    %c256_8 = arith.constant 256 : index
    %10 = vector.load %arg2[%c0_7, %c256_8] : memref<1x768xf32, #tpu.memory_space<vmem>>, vector<1x128xf32>
    %11 = vector.broadcast %10 : vector<1x128xf32> to vector<128x128xf32>
    %12 = arith.mulf %9, %11 : vector<128x128xf32>
    %13 = arith.addf %8, %12 : vector<128x128xf32>
    %c0_9 = arith.constant 0 : index
    %c384 = arith.constant 384 : index
    %14 = vector.load %arg1[%c0_9, %c384] : memref<128x768xf32, #tpu.memory_space<vmem>>, vector<128x128xf32>
    %c0_10 = arith.constant 0 : index
    %c384_11 = arith.constant 384 : index
    %15 = vector.load %arg2[%c0_10, %c384_11] : memref<1x768xf32, #tpu.memory_space<vmem>>, vector<1x128xf32>
    %16 = vector.broadcast %15 : vector<1x128xf32> to vector<128x128xf32>
    %17 = arith.mulf %14, %16 : vector<128x128xf32>
    %18 = arith.addf %13, %17 : vector<128x128xf32>
    %c0_12 = arith.constant 0 : index
    %c512 = arith.constant 512 : index
    %19 = vector.load %arg1[%c0_12, %c512] : memref<128x768xf32, #tpu.memory_space<vmem>>, vector<128x128xf32>
    %c0_13 = arith.constant 0 : index
    %c512_14 = arith.constant 512 : index
    %20 = vector.load %arg2[%c0_13, %c512_14] : memref<1x768xf32, #tpu.memory_space<vmem>>, vector<1x128xf32>
    %21 = vector.broadcast %20 : vector<1x128xf32> to vector<128x128xf32>
    %22 = arith.mulf %19, %21 : vector<128x128xf32>
    %23 = arith.addf %18, %22 : vector<128x128xf32>
    %c0_15 = arith.constant 0 : index
    %c640 = arith.constant 640 : index
    %24 = vector.load %arg1[%c0_15, %c640] : memref<128x768xf32, #tpu.memory_space<vmem>>, vector<128x128xf32>
    %c0_16 = arith.constant 0 : index
    %c640_17 = arith.constant 640 : index
    %25 = vector.load %arg2[%c0_16, %c640_17] : memref<1x768xf32, #tpu.memory_space<vmem>>, vector<1x128xf32>
    %26 = vector.broadcast %25 : vector<1x128xf32> to vector<128x128xf32>
    %27 = arith.mulf %24, %26 : vector<128x128xf32>
    %28 = arith.addf %23, %27 : vector<128x128xf32>
    %cst = arith.constant dense<0.000000e+00> : vector<128xf32>
    %29 = vector.multi_reduction <add>, %28, %cst [1] : vector<128x128xf32> to vector<128xf32>
    %30 = vector.shape_cast %29 : vector<128xf32> to vector<128x1xf32>
    %c0_18 = arith.constant 0 : index
    %31 = memref.load %arg3[%c0_18] : memref<1xf32, #tpu.memory_space<smem>>
    %32 = vector.broadcast %31 : f32 to vector<128x1xf32>
    %33 = arith.addf %30, %32 : vector<128x1xf32>
    %34 = arith.negf %33 : vector<128x1xf32>
    %35 = math.exp %34 : vector<128x1xf32>
    %cst_19 = arith.constant 1.000000e+00 : f32
    %36 = vector.broadcast %cst_19 : f32 to vector<128x1xf32>
    %37 = arith.addf %36, %35 : vector<128x1xf32>
    %38 = arith.divf %36, %37 : vector<128x1xf32>
    %39 = tpu.iota {dimensions = array<i32: 0>} : vector<128x128xi32>
    %40 = tpu.iota {dimensions = array<i32: 1>} : vector<128x128xi32>
    %c127_i32 = arith.constant 127 : i32
    %41 = vector.broadcast %c127_i32 : i32 to vector<128x128xi32>
    %42 = arith.andi %39, %41 : vector<128x128xi32>
    %43 = arith.cmpi eq, %42, %40 : vector<128x128xi32>
    %cst_20 = arith.constant 0.000000e+00 : f32
    %44 = vector.shape_cast %38 : vector<128x1xf32> to vector<128x1xf32>
    %45 = vector.broadcast %44 : vector<128x1xf32> to vector<128x128xf32>
    %46 = vector.broadcast %cst_20 : f32 to vector<128x128xf32>
    %47 = arith.select %43, %45, %46 : vector<128x128xi1>, vector<128x128xf32>
    %48 = vector.shape_cast %47 : vector<128x128xf32> to vector<1x128x128xf32>
    %cst_21 = arith.constant dense<0.000000e+00> : vector<1x128xf32>
    %49 = vector.multi_reduction <add>, %48, %cst_21 [1] : vector<1x128x128xf32> to vector<1x128xf32>
    %c0_22 = arith.constant 0 : index
    %c0_23 = arith.constant 0 : index
    %c0_24 = arith.constant 0 : index
    %50 = vector.load %arg4[%c0_22, %c0_23, %c0_24] : memref<1x1x128xf32, #tpu.memory_space<vmem>>, vector<1x1x128xf32>
    %51 = vector.shape_cast %50 : vector<1x1x128xf32> to vector<1x128xf32>
    %52 = vector.shape_cast %49 : vector<1x128xf32> to vector<1x1x128xf32>
    tpu.vector_store %arg4[%c0_22, %c0_23, %c0_24], %52 {strides = array<i32>} : memref<1x1x128xf32, #tpu.memory_space<vmem>>, vector<1x1x128xf32>,
    return
  }
  func.func @transform_0(%arg0: i32) -> (i32, i32) {
    %c0_i32 = arith.constant 0 : i32
    %c0_i32_0 = arith.constant 0 : i32
    return %arg0, %c0_i32 : i32, i32
  }
  func.func @transform_1(%arg0: i32) -> (i32, i32) {
    %c0_i32 = arith.constant 0 : i32
    %c0_i32_0 = arith.constant 0 : i32
    %c0_i32_1 = arith.constant 0 : i32
    return %c0_i32, %c0_i32_0 : i32, i32
  }
  func.func @transform_2(%arg0: i32) -> i32 {
    %c0_i32 = arith.constant 0 : i32
    %c0_i32_0 = arith.constant 0 : i32
    return %c0_i32 : i32
  }
  func.func @transform_3(%arg0: i32) -> (i32, i32, i32) {
    %c0_i32 = arith.constant 0 : i32
    %c0_i32_0 = arith.constant 0 : i32
    %c0_i32_1 = arith.constant 0 : i32
    return %arg0, %c0_i32, %c0_i32_0 : i32, i32, i32
  }
}

</mosaic_0001>

<llo_original>
// kernel: tpu_custom_call.1
$region0: #{tpu_custom_call.1}
  #allocation0 [shape = 'u32[]', space=smem, size = 0x4, offset = 0x4, fixed_abs, tag = 'smem constant byte address 0x4 - core index']
  #allocation1 [shape = 'u32[144,128]{1,0:T(1,128)}', space=vmem, size = 0x12000, scoped, tag = 'internal scratch']
  #allocation2 [shape = 'f32[1]{0:T(128)S(6)}', space=smem, size = 0x200, scoped, tag = 'scoped memory for tpu_custom_call.1']
  %s0 = inlined_call_operand.hbm [shape: f32[128,768], index: 0, kind: input, shape index: {}]
  %s1 = inlined_call_operand.vmem [shape: f32[1,768], index: 1, kind: input, shape index: {}]
  %s2 = inlined_call_operand.<no memory space> [shape: f32[1], index: 2, kind: input, shape index: {}]
  %s3 = inlined_call_operand.hbm [shape: f32[1,1,128], index: 3, kind: output, shape index: {}]
  %s4 = sld [smem:[#allocation0]]
  $region26: #{tpu_custom_call.1} parent=0
    _
  %s6 = ssub.s32 1, %s4
  %s7 = scalar_select 0, %s6, %s4
  %8 = sst [smem:[#allocation2]] %s2
  $region1: #{tpu_custom_call.1} parent=0
    #allocation3 [shape = 'u8[393216]{0}', space=vmem, size = 0x60000, scoped, tag = 'input window, operand 0, single buffered']
    #allocation4 [shape = 's32[1]{0}', space=sflag, size = 0x4, scoped, tag = 'scoped memory for tpu_custom_call.1']
    #allocation5 [shape = 's32[1]{0}', space=sflag, size = 0x4, scoped, tag = 'scoped memory for tpu_custom_call.1']
    #allocation6 [shape = 'u8[512]{0}', space=vmem, size = 0x400, scoped, tag = 'output window, operand 0, single buffered']
    %9 = vsyncpa [#allocation4], 0
    %10 = vsyncpa [#allocation5], 0
    // Predicated region
    $region2: #{tpu_custom_call.1} parent=1 // pred_check
      _
    $region3: #{tpu_custom_call.1} parent=1 // pred_check_branch
      %12 = sbr.rel (0) target = $region5
    $region4: #{tpu_custom_call.1} parent=1 // pred_region
      %s14 = ssub.s32 12288, 12288
      %15 = vsyncadd [#allocation4], %s14
      %s16 = sshll.u32 [#allocation3], 4
      %s17 = int_to_ptr.vmem [resolvable:$true] %s16
      %22 = dma.hbm_to_vmem [thread:$0]  %s0, 12288, %s17, [#allocation4], 768, 768, 48
    $region5: #{tpu_custom_call.1} parent=1 // pred_fallthru
      _
    // Predicated region
    $region6: #{tpu_custom_call.1} parent=1 // pred_check
      _
    $region7: #{tpu_custom_call.1} parent=1 // pred_check_branch
      %24 = sbr.rel (0) target = $region9
    $region8: #{tpu_custom_call.1} parent=1 // pred_region
      _
    $region9: #{tpu_custom_call.1} parent=1 // pred_fallthru
      _
    // Predicated region
    $region10: #{tpu_custom_call.1} parent=1 // pred_check
      _
    $region11: #{tpu_custom_call.1} parent=1 // pred_check_branch
      %26 = sbr.rel (0) target = $region13
    $region12: #{tpu_custom_call.1} parent=1 // pred_region
      _
    $region13: #{tpu_custom_call.1} parent=1 // pred_fallthru
      _
    // Predicated region
    $region14: #{tpu_custom_call.1} parent=1 // pred_check
      _
    $region15: #{tpu_custom_call.1} parent=1 // pred_check_branch
      %28 = sbr.rel (0) target = $region17
    $region16: #{tpu_custom_call.1} parent=1 // pred_region
      %29 = dma.done [#allocation4], 12288
    $region17: #{tpu_custom_call.1} parent=1 // pred_fallthru
      _
    %v30 = vld [vmem:[#allocation3] sm:$0xff]
    %v31 = vld [vmem:[#allocation3 + $0x30] sm:$0xff]
    %v32 = vld [vmem:[#allocation3 + $0x60] sm:$0xff]
    %v33 = vld [vmem:[#allocation3 + $0x90] sm:$0xff]
    %v34 = vld [vmem:[#allocation3 + $0xc0] sm:$0xff]
    %v35 = vld [vmem:[#allocation3 + $0xf0] sm:$0xff]
    %v36 = vld [vmem:[#allocation3 + $0x120] sm:$0xff]
    %v37 = vld [vmem:[#allocation3 + $0x150] sm:$0xff]
    %v38 = vld [vmem:[#allocation3 + $0x180] sm:$0xff]
    %v39 = vld [vmem:[#allocation3 + $0x1b0] sm:$0xff]
    %v40 = vld [vmem:[#allocation3 + $0x1e0] sm:$0xff]
    %v41 = vld [vmem:[#allocation3 + $0x210] sm:$0xff]
    %v42 = vld [vmem:[#allocation3 + $0x240] sm:$0xff]
    %v43 = vld [vmem:[#allocation3 + $0x270] sm:$0xff]
    %v44 = vld [vmem:[#allocation3 + $0x2a0] sm:$0xff]
    %v45 = vld [vmem:[#allocation3 + $0x2d0] sm:$0xff]
    %v46 = vld [vmem:[%s1] sm:$0x1]
    %v48 = vlaneseq
    %v49 = vshrl.u32 %v48, 7
    %v50 = vsub.s32 0, %v49
    %v51 = vrot.slane %v46, %v50
    %v53 = vmul.f32 %v30, %v51
    %v54 = vmul.f32 %v31, %v51
    %v55 = vmul.f32 %v32, %v51
    %v56 = vmul.f32 %v33, %v51
    %v57 = vmul.f32 %v34, %v51
    %v58 = vmul.f32 %v35, %v51
    %v59 = vmul.f32 %v36, %v51
    %v60 = vmul.f32 %v37, %v51
    %v61 = vmul.f32 %v38, %v51
    %v62 = vmul.f32 %v39, %v51
    %v63 = vmul.f32 %v40, %v51
    %v64 = vmul.f32 %v41, %v51
    %v65 = vmul.f32 %v42, %v51
    %v66 = vmul.f32 %v43, %v51
    %v67 = vmul.f32 %v44, %v51
    %v68 = vmul.f32 %v45, %v51
    %v69 = vld [vmem:[#allocation3 + $0x8] sm:$0xff]
    %v70 = vld [vmem:[#allocation3 + $0x38] sm:$0xff]
    %v71 = vld [vmem:[#allocation3 + $0x68] sm:$0xff]
    %v72 = vld [vmem:[#allocation3 + $0x98] sm:$0xff]
    %v73 = vld [vmem:[#allocation3 + $0xc8] sm:$0xff]
    %v74 = vld [vmem:[#allocation3 + $0xf8] sm:$0xff]
    %v75 = vld [vmem:[#allocation3 + $0x128] sm:$0xff]
    %v76 = vld [vmem:[#allocation3 + $0x158] sm:$0xff]
    %v77 = vld [vmem:[#allocation3 + $0x188] sm:$0xff]
    %v78 = vld [vmem:[#allocation3 + $0x1b8] sm:$0xff]
    %v79 = vld [vmem:[#allocation3 + $0x1e8] sm:$0xff]
    %v80 = vld [vmem:[#allocation3 + $0x218] sm:$0xff]
    %v81 = vld [vmem:[#allocation3 + $0x248] sm:$0xff]
    %v82 = vld [vmem:[#allocation3 + $0x278] sm:$0xff]
    %v83 = vld [vmem:[#allocation3 + $0x2a8] sm:$0xff]
    %v84 = vld [vmem:[#allocation3 + $0x2d8] sm:$0xff]
    %v85 = vld [vmem:[%s1 + $0x1] sm:$0x1]
    %v87 = vlaneseq
    %v88 = vshrl.u32 %v87, 7
    %v89 = vsub.s32 0, %v88
    %v90 = vrot.slane %v85, %v89
    %v92 = vmul.f32 %v69, %v90
    %v93 = vmul.f32 %v70, %v90
    %v94 = vmul.f32 %v71, %v90
    %v95 = vmul.f32 %v72, %v90
    %v96 = vmul.f32 %v73, %v90
    %v97 = vmul.f32 %v74, %v90
    %v98 = vmul.f32 %v75, %v90
    %v99 = vmul.f32 %v76, %v90
    %v100 = vmul.f32 %v77, %v90
    %v101 = vmul.f32 %v78, %v90
    %v102 = vmul.f32 %v79, %v90
    %v103 = vmul.f32 %v80, %v90
    %v104 = vmul.f32 %v81, %v90
    %v105 = vmul.f32 %v82, %v90
    %v106 = vmul.f32 %v83, %v90
    %v107 = vmul.f32 %v84, %v90
    %v108 = vadd.f32 %v53, %v92
    %v109 = vadd.f32 %v54, %v93
    %v110 = vadd.f32 %v55, %v94
    %v111 = vadd.f32 %v56, %v95
    %v112 = vadd.f32 %v57, %v96
    %v113 = vadd.f32 %v58, %v97
    %v114 = vadd.f32 %v59, %v98
    %v115 = vadd.f32 %v60, %v99
    %v116 = vadd.f32 %v61, %v100
    %v117 = vadd.f32 %v62, %v101
    %v118 = vadd.f32 %v63, %v102
    %v119 = vadd.f32 %v64, %v103
    %v120 = vadd.f32 %v65, %v104
    %v121 = vadd.f32 %v66, %v105
    %v122 = vadd.f32 %v67, %v106
    %v123 = vadd.f32 %v68, %v107
    %v124 = vld [vmem:[#allocation3 + $0x10] sm:$0xff]
    %v125 = vld [vmem:[#allocation3 + $0x40] sm:$0xff]
    %v126 = vld [vmem:[#allocation3 + $0x70] sm:$0xff]
    %v127 = vld [vmem:[#allocation3 + $0xa0] sm:$0xff]
    %v128 = vld [vmem:[#allocation3 + $0xd0] sm:$0xff]
    %v129 = vld [vmem:[#allocation3 + $0x100] sm:$0xff]
    %v130 = vld [vmem:[#allocation3 + $0x130] sm:$0xff]
    %v131 = vld [vmem:[#allocation3 + $0x160] sm:$0xff]
    %v132 = vld [vmem:[#allocation3 + $0x190] sm:$0xff]
    %v133 = vld [vmem:[#allocation3 + $0x1c0] sm:$0xff]
    %v134 = vld [vmem:[#allocation3 + $0x1f0] sm:$0xff]
    %v135 = vld [vmem:[#allocation3 + $0x220] sm:$0xff]
    %v136 = vld [vmem:[#allocation3 + $0x250] sm:$0xff]
    %v137 = vld [vmem:[#allocation3 + $0x280] sm:$0xff]
    %v138 = vld [vmem:[#allocation3 + $0x2b0] sm:$0xff]
    %v139 = vld [vmem:[#allocation3 + $0x2e0] sm:$0xff]
    %v140 = vld [vmem:[%s1 + $0x2] sm:$0x1]
    %v142 = vlaneseq
    %v143 = vshrl.u32 %v142, 7
    %v144 = vsub.s32 0, %v143
    %v145 = vrot.slane %v140, %v144
    %v147 = vmul.f32 %v124, %v145
    %v148 = vmul.f32 %v125, %v145
    %v149 = vmul.f32 %v126, %v145
    %v150 = vmul.f32 %v127, %v145
    %v151 = vmul.f32 %v128, %v145
    %v152 = vmul.f32 %v129, %v145
    %v153 = vmul.f32 %v130, %v145
    %v154 = vmul.f32 %v131, %v145
    %v155 = vmul.f32 %v132, %v145
    %v156 = vmul.f32 %v133, %v145
    %v157 = vmul.f32 %v134, %v145
    %v158 = vmul.f32 %v135, %v145
    %v159 = vmul.f32 %v136, %v145
    %v160 = vmul.f32 %v137, %v145
    %v161 = vmul.f32 %v138, %v145
    %v162 = vmul.f32 %v139, %v145
    %v163 = vadd.f32 %v108, %v147
    %v164 = vadd.f32 %v109, %v148
    %v165 = vadd.f32 %v110, %v149
    %v166 = vadd.f32 %v111, %v150
    %v167 = vadd.f32 %v112, %v151
    %v168 = vadd.f32 %v113, %v152
    %v169 = vadd.f32 %v114, %v153
    %v170 = vadd.f32 %v115, %v154
    %v171 = vadd.f32 %v116, %v155
    %v172 = vadd.f32 %v117, %v156
    %v173 = vadd.f32 %v118, %v157
    %v174 = vadd.f32 %v119, %v158
    %v175 = vadd.f32 %v120, %v159
    %v176 = vadd.f32 %v121, %v160
    %v177 = vadd.f32 %v122, %v161
    %v178 = vadd.f32 %v123, %v162
    %v179 = vld [vmem:[#allocation3 + $0x18] sm:$0xff]
    %v180 = vld [vmem:[#allocation3 + $0x48] sm:$0xff]
    %v181 = vld [vmem:[#allocation3 + $0x78] sm:$0xff]
    %v182 = vld [vmem:[#allocation3 + $0xa8] sm:$0xff]
    %v183 = vld [vmem:[#allocation3 + $0xd8] sm:$0xff]
    %v184 = vld [vmem:[#allocation3 + $0x108] sm:$0xff]
    %v185 = vld [vmem:[#allocation3 + $0x138] sm:$0xff]
    %v186 = vld [vmem:[#allocation3 + $0x168] sm:$0xff]
    %v187 = vld [vmem:[#allocation3 + $0x198] sm:$0xff]
    %v188 = vld [vmem:[#allocation3 + $0x1c8] sm:$0xff]
    %v189 = vld [vmem:[#allocation3 + $0x1f8] sm:$0xff]
    %v190 = vld [vmem:[#allocation3 + $0x228] sm:$0xff]
    %v191 = vld [vmem:[#allocation3 + $0x258] sm:$0xff]
    %v192 = vld [vmem:[#allocation3 + $0x288] sm:$0xff]
    %v193 = vld [vmem:[#allocation3 + $0x2b8] sm:$0xff]
    %v194 = vld [vmem:[#allocation3 + $0x2e8] sm:$0xff]
    %v195 = vld [vmem:[%s1 + $0x3] sm:$0x1]
    %v197 = vlaneseq
    %v198 = vshrl.u32 %v197, 7
    %v199 = vsub.s32 0, %v198
    %v200 = vrot.slane %v195, %v199
    %v202 = vmul.f32 %v179, %v200
    %v203 = vmul.f32 %v180, %v200
    %v204 = vmul.f32 %v181, %v200
    %v205 = vmul.f32 %v182, %v200
    %v206 = vmul.f32 %v183, %v200
    %v207 = vmul.f32 %v184, %v200
    %v208 = vmul.f32 %v185, %v200
    %v209 = vmul.f32 %v186, %v200
    %v210 = vmul.f32 %v187, %v200
    %v211 = vmul.f32 %v188, %v200
    %v212 = vmul.f32 %v189, %v200
    %v213 = vmul.f32 %v190, %v200
    %v214 = vmul.f32 %v191, %v200
    %v215 = vmul.f32 %v192, %v200
    %v216 = vmul.f32 %v193, %v200
    %v217 = vmul.f32 %v194, %v200
    %v218 = vadd.f32 %v163, %v202
    %v219 = vadd.f32 %v164, %v203
    %v220 = vadd.f32 %v165, %v204
    %v221 = vadd.f32 %v166, %v205
    %v222 = vadd.f32 %v167, %v206
    %v223 = vadd.f32 %v168, %v207
    %v224 = vadd.f32 %v169, %v208
    %v225 = vadd.f32 %v170, %v209
    %v226 = vadd.f32 %v171, %v210
    %v227 = vadd.f32 %v172, %v211
    %v228 = vadd.f32 %v173, %v212
    %v229 = vadd.f32 %v174, %v213
    %v230 = vadd.f32 %v175, %v214
    %v231 = vadd.f32 %v176, %v215
    %v232 = vadd.f32 %v177, %v216
    %v233 = vadd.f32 %v178, %v217
    %v234 = vld [vmem:[#allocation3 + $0x20] sm:$0xff]
    %v235 = vld [vmem:[#allocation3 + $0x50] sm:$0xff]
    %v236 = vld [vmem:[#allocation3 + $0x80] sm:$0xff]
    %v237 = vld [vmem:[#allocation3 + $0xb0] sm:$0xff]
    %v238 = vld [vmem:[#allocation3 + $0xe0] sm:$0xff]
    %v239 = vld [vmem:[#allocation3 + $0x110] sm:$0xff]
    %v240 = vld [vmem:[#allocation3 + $0x140] sm:$0xff]
    %v241 = vld [vmem:[#allocation3 + $0x170] sm:$0xff]
    %v242 = vld [vmem:[#allocation3 + $0x1a0] sm:$0xff]
    %v243 = vld [vmem:[#allocation3 + $0x1d0] sm:$0xff]
    %v244 = vld [vmem:[#allocation3 + $0x200] sm:$0xff]
    %v245 = vld [vmem:[#allocation3 + $0x230] sm:$0xff]
    %v246 = vld [vmem:[#allocation3 + $0x260] sm:$0xff]
    %v247 = vld [vmem:[#allocation3 + $0x290] sm:$0xff]
    %v248 = vld [vmem:[#allocation3 + $0x2c0] sm:$0xff]
    %v249 = vld [vmem:[#allocation3 + $0x2f0] sm:$0xff]
    %v250 = vld [vmem:[%s1 + $0x4] sm:$0x1]
    %v252 = vlaneseq
    %v253 = vshrl.u32 %v252, 7
    %v254 = vsub.s32 0, %v253
    %v255 = vrot.slane %v250, %v254
    %v257 = vmul.f32 %v234, %v255
    %v258 = vmul.f32 %v235, %v255
    %v259 = vmul.f32 %v236, %v255
    %v260 = vmul.f32 %v237, %v255
    %v261 = vmul.f32 %v238, %v255
    %v262 = vmul.f32 %v239, %v255
    %v263 = vmul.f32 %v240, %v255
    %v264 = vmul.f32 %v241, %v255
    %v265 = vmul.f32 %v242, %v255
    %v266 = vmul.f32 %v243, %v255
    %v267 = vmul.f32 %v244, %v255
    %v268 = vmul.f32 %v245, %v255
    %v269 = vmul.f32 %v246, %v255
    %v270 = vmul.f32 %v247, %v255
    %v271 = vmul.f32 %v248, %v255
    %v272 = vmul.f32 %v249, %v255
    %v273 = vadd.f32 %v218, %v257
    %v274 = vadd.f32 %v219, %v258
    %v275 = vadd.f32 %v220, %v259
    %v276 = vadd.f32 %v221, %v260
    %v277 = vadd.f32 %v222, %v261
    %v278 = vadd.f32 %v223, %v262
    %v279 = vadd.f32 %v224, %v263
    %v280 = vadd.f32 %v225, %v264
    %v281 = vadd.f32 %v226, %v265
    %v282 = vadd.f32 %v227, %v266
    %v283 = vadd.f32 %v228, %v267
    %v284 = vadd.f32 %v229, %v268
    %v285 = vadd.f32 %v230, %v269
    %v286 = vadd.f32 %v231, %v270
    %v287 = vadd.f32 %v232, %v271
    %v288 = vadd.f32 %v233, %v272
    %v289 = vld [vmem:[#allocation3 + $0x28] sm:$0xff]
    %v290 = vld [vmem:[#allocation3 + $0x58] sm:$0xff]
    %v291 = vld [vmem:[#allocation3 + $0x88] sm:$0xff]
    %v292 = vld [vmem:[#allocation3 + $0xb8] sm:$0xff]
    %v293 = vld [vmem:[#allocation3 + $0xe8] sm:$0xff]
    %v294 = vld [vmem:[#allocation3 + $0x118] sm:$0xff]
    %v295 = vld [vmem:[#allocation3 + $0x148] sm:$0xff]
    %v296 = vld [vmem:[#allocation3 + $0x178] sm:$0xff]
    %v297 = vld [vmem:[#allocation3 + $0x1a8] sm:$0xff]
    %v298 = vld [vmem:[#allocation3 + $0x1d8] sm:$0xff]
    %v299 = vld [vmem:[#allocation3 + $0x208] sm:$0xff]
    %v300 = vld [vmem:[#allocation3 + $0x238] sm:$0xff]
    %v301 = vld [vmem:[#allocation3 + $0x268] sm:$0xff]
    %v302 = vld [vmem:[#allocation3 + $0x298] sm:$0xff]
    %v303 = vld [vmem:[#allocation3 + $0x2c8] sm:$0xff]
    %v304 = vld [vmem:[#allocation3 + $0x2f8] sm:$0xff]
    %v305 = vld [vmem:[%s1 + $0x5] sm:$0x1]
    %v307 = vlaneseq
    %v308 = vshrl.u32 %v307, 7
    %v309 = vsub.s32 0, %v308
    %v310 = vrot.slane %v305, %v309
    %v312 = vmul.f32 %v289, %v310
    %v313 = vmul.f32 %v290, %v310
    %v314 = vmul.f32 %v291, %v310
    %v315 = vmul.f32 %v292, %v310
    %v316 = vmul.f32 %v293, %v310
    %v317 = vmul.f32 %v294, %v310
    %v318 = vmul.f32 %v295, %v310
    %v319 = vmul.f32 %v296, %v310
    %v320 = vmul.f32 %v297, %v310
    %v321 = vmul.f32 %v298, %v310
    %v322 = vmul.f32 %v299, %v310
    %v323 = vmul.f32 %v300, %v310
    %v324 = vmul.f32 %v301, %v310
    %v325 = vmul.f32 %v302, %v310
    %v326 = vmul.f32 %v303, %v310
    %v327 = vmul.f32 %v304, %v310
    %v328 = vadd.f32 %v273, %v312
    %v329 = vadd.f32 %v274, %v313
    %v330 = vadd.f32 %v275, %v314
    %v331 = vadd.f32 %v276, %v315
    %v332 = vadd.f32 %v277, %v316
    %v333 = vadd.f32 %v278, %v317
    %v334 = vadd.f32 %v279, %v318
    %v335 = vadd.f32 %v280, %v319
    %v336 = vadd.f32 %v281, %v320
    %v337 = vadd.f32 %v282, %v321
    %v338 = vadd.f32 %v283, %v322
    %v339 = vadd.f32 %v284, %v323
    %v340 = vadd.f32 %v285, %v324
    %v341 = vadd.f32 %v286, %v325
    %v342 = vadd.f32 %v287, %v326
    %v343 = vadd.f32 %v288, %v327
    %344 = vadd.xlane.f32.xlu0 %v328
    %v345 = vpop.xlane.xlu0 %344
    %346 = vadd.xlane.f32.xlu0 %v329
    %v347 = vpop.xlane.xlu0 %346
    %348 = vadd.xlane.f32.xlu0 %v330
    %v349 = vpop.xlane.xlu0 %348
    %350 = vadd.xlane.f32.xlu0 %v331
    %v351 = vpop.xlane.xlu0 %350
    %352 = vadd.xlane.f32.xlu0 %v332
    %v353 = vpop.xlane.xlu0 %352
    %354 = vadd.xlane.f32.xlu0 %v333
    %v355 = vpop.xlane.xlu0 %354
    %356 = vadd.xlane.f32.xlu0 %v334
    %v357 = vpop.xlane.xlu0 %356
    %358 = vadd.xlane.f32.xlu0 %v335
    %v359 = vpop.xlane.xlu0 %358
    %360 = vadd.xlane.f32.xlu0 %v336
    %v361 = vpop.xlane.xlu0 %360
    %362 = vadd.xlane.f32.xlu0 %v337
    %v363 = vpop.xlane.xlu0 %362
    %364 = vadd.xlane.f32.xlu0 %v338
    %v365 = vpop.xlane.xlu0 %364
    %366 = vadd.xlane.f32.xlu0 %v339
    %v367 = vpop.xlane.xlu0 %366
    %368 = vadd.xlane.f32.xlu0 %v340
    %v369 = vpop.xlane.xlu0 %368
    %370 = vadd.xlane.f32.xlu0 %v341
    %v371 = vpop.xlane.xlu0 %370
    %372 = vadd.xlane.f32.xlu0 %v342
    %v373 = vpop.xlane.xlu0 %372
    %374 = vadd.xlane.f32.xlu0 %v343
    %v375 = vpop.xlane.xlu0 %374
    %s376 = sld [smem:[#allocation2]]
    %v377 = vstv %s376
    %v378 = vadd.f32 %v345, %v377
    %v379 = vadd.f32 %v347, %v377
    %v380 = vadd.f32 %v349, %v377
    %v381 = vadd.f32 %v351, %v377
    %v382 = vadd.f32 %v353, %v377
    %v383 = vadd.f32 %v355, %v377
    %v384 = vadd.f32 %v357, %v377
    %v385 = vadd.f32 %v359, %v377
    %v386 = vadd.f32 %v361, %v377
    %v387 = vadd.f32 %v363, %v377
    %v388 = vadd.f32 %v365, %v377
    %v389 = vadd.f32 %v367, %v377
    %v390 = vadd.f32 %v369, %v377
    %v391 = vadd.f32 %v371, %v377
    %v392 = vadd.f32 %v373, %v377
    %v393 = vadd.f32 %v375, %v377
    %v394 = vxor.u32 %v378, 2147483648
    %v395 = vxor.u32 %v379, 2147483648
    %v396 = vxor.u32 %v380, 2147483648
    %v397 = vxor.u32 %v381, 2147483648
    %v398 = vxor.u32 %v382, 2147483648
    %v399 = vxor.u32 %v383, 2147483648
    %v400 = vxor.u32 %v384, 2147483648
    %v401 = vxor.u32 %v385, 2147483648
    %v402 = vxor.u32 %v386, 2147483648
    %v403 = vxor.u32 %v387, 2147483648
    %v404 = vxor.u32 %v388, 2147483648
    %v405 = vxor.u32 %v389, 2147483648
    %v406 = vxor.u32 %v390, 2147483648
    %v407 = vxor.u32 %v391, 2147483648
    %v408 = vxor.u32 %v392, 2147483648
    %v409 = vxor.u32 %v393, 2147483648
    %v410 = vmul.f32 %v394, 1.442695
    %v411 = vpow.pop %v410
    %v412 = vmul.f32 %v395, 1.442695
    %v413 = vpow.pop %v412
    %v414 = vmul.f32 %v396, 1.442695
    %v415 = vpow.pop %v414
    %v416 = vmul.f32 %v397, 1.442695
    %v417 = vpow.pop %v416
    %v418 = vmul.f32 %v398, 1.442695
    %v419 = vpow.pop %v418
    %v420 = vmul.f32 %v399, 1.442695
    %v421 = vpow.pop %v420
    %v422 = vmul.f32 %v400, 1.442695
    %v423 = vpow.pop %v422
    %v424 = vmul.f32 %v401, 1.442695
    %v425 = vpow.pop %v424
    %v426 = vmul.f32 %v402, 1.442695
    %v427 = vpow.pop %v426
    %v428 = vmul.f32 %v403, 1.442695
    %v429 = vpow.pop %v428
    %v430 = vmul.f32 %v404, 1.442695
    %v431 = vpow.pop %v430
    %v432 = vmul.f32 %v405, 1.442695
    %v433 = vpow.pop %v432
    %v434 = vmul.f32 %v406, 1.442695
    %v435 = vpow.pop %v434
    %v436 = vmul.f32 %v407, 1.442695
    %v437 = vpow.pop %v436
    %v438 = vmul.f32 %v408, 1.442695
    %v439 = vpow.pop %v438
    %v440 = vmul.f32 %v409, 1.442695
    %v441 = vpow.pop %v440
    %v442 = vadd.f32 %v411, 1.0
    %v443 = vadd.f32 %v413, 1.0
    %v444 = vadd.f32 %v415, 1.0
    %v445 = vadd.f32 %v417, 1.0
    %v446 = vadd.f32 %v419, 1.0
    %v447 = vadd.f32 %v421, 1.0
    %v448 = vadd.f32 %v423, 1.0
    %v449 = vadd.f32 %v425, 1.0
    %v450 = vadd.f32 %v427, 1.0
    %v451 = vadd.f32 %v429, 1.0
    %v452 = vadd.f32 %v431, 1.0
    %v453 = vadd.f32 %v433, 1.0
    %v454 = vadd.f32 %v435, 1.0
    %v455 = vadd.f32 %v437, 1.0
    %v456 = vadd.f32 %v439, 1.0
    %v457 = vadd.f32 %v441, 1.0
    %v458 = vrcp.pop %v442
    %v459 = vmul.f32 1.0, %v458
    %v460 = vrcp.pop %v443
    %v461 = vmul.f32 1.0, %v460
    %v462 = vrcp.pop %v444
    %v463 = vmul.f32 1.0, %v462
    %v464 = vrcp.pop %v445
    %v465 = vmul.f32 1.0, %v464
    %v466 = vrcp.pop %v446
    %v467 = vmul.f32 1.0, %v466
    %v468 = vrcp.pop %v447
    %v469 = vmul.f32 1.0, %v468
    %v470 = vrcp.pop %v448
    %v471 = vmul.f32 1.0, %v470
    %v472 = vrcp.pop %v449
    %v473 = vmul.f32 1.0, %v472
    %v474 = vrcp.pop %v450
    %v475 = vmul.f32 1.0, %v474
    %v476 = vrcp.pop %v451
    %v477 = vmul.f32 1.0, %v476
    %v478 = vrcp.pop %v452
    %v479 = vmul.f32 1.0, %v478
    %v480 = vrcp.pop %v453
    %v481 = vmul.f32 1.0, %v480
    %v482 = vrcp.pop %v454
    %v483 = vmul.f32 1.0, %v482
    %v484 = vrcp.pop %v455
    %v485 = vmul.f32 1.0, %v484
    %v486 = vrcp.pop %v456
    %v487 = vmul.f32 1.0, %v486
    %v488 = vrcp.pop %v457
    %v489 = vmul.f32 1.0, %v488
    %v490 = vlaneseq
    %v491 = vshrl.u32 %v490, 7
    %v492 = vadd.s32 %v491, 8
    %v493 = vadd.s32 %v491, 16
    %v494 = vadd.s32 %v491, 24
    %v495 = vadd.s32 %v491, 32
    %v496 = vadd.s32 %v491, 40
    %v497 = vadd.s32 %v491, 48
    %v498 = vadd.s32 %v491, 56
    %v499 = vadd.s32 %v491, 64
    %v500 = vadd.s32 %v491, 72
    %v501 = vadd.s32 %v491, 80
    %v502 = vadd.s32 %v491, 88
    %v503 = vadd.s32 %v491, 96
    %v504 = vadd.s32 %v491, 104
    %v505 = vadd.s32 %v491, 112
    %v506 = vadd.s32 %v491, 120
    %v507 = vlaneseq
    %v508 = vand.u32 %v507, 127
    %v509 = vand.u32 %v491, 127
    %v510 = vand.u32 %v492, 127
    %v511 = vand.u32 %v493, 127
    %v512 = vand.u32 %v494, 127
    %v513 = vand.u32 %v495, 127
    %v514 = vand.u32 %v496, 127
    %v515 = vand.u32 %v497, 127
    %v516 = vand.u32 %v498, 127
    %v517 = vand.u32 %v499, 127
    %v518 = vand.u32 %v500, 127
    %v519 = vand.u32 %v501, 127
    %v520 = vand.u32 %v502, 127
    %v521 = vand.u32 %v503, 127
    %v522 = vand.u32 %v504, 127
    %v523 = vand.u32 %v505, 127
    %v524 = vand.u32 %v506, 127
    %vm525 = vcmp.eq.s32.totalorder %v509, %v508
    %vm526 = vcmp.eq.s32.totalorder %v510, %v508
    %vm527 = vcmp.eq.s32.totalorder %v511, %v508
    %vm528 = vcmp.eq.s32.totalorder %v512, %v508
    %vm529 = vcmp.eq.s32.totalorder %v513, %v508
    %vm530 = vcmp.eq.s32.totalorder %v514, %v508
    %vm531 = vcmp.eq.s32.totalorder %v515, %v508
    %vm532 = vcmp.eq.s32.totalorder %v516, %v508
    %vm533 = vcmp.eq.s32.totalorder %v517, %v508
    %vm534 = vcmp.eq.s32.totalorder %v518, %v508
    %vm535 = vcmp.eq.s32.totalorder %v519, %v508
    %vm536 = vcmp.eq.s32.totalorder %v520, %v508
    %vm537 = vcmp.eq.s32.totalorder %v521, %v508
    %vm538 = vcmp.eq.s32.totalorder %v522, %v508
    %vm539 = vcmp.eq.s32.totalorder %v523, %v508
    %vm540 = vcmp.eq.s32.totalorder %v524, %v508
    %v541 = vsel %vm525, %v459, 0.0
    %v542 = vsel %vm526, %v461, 0.0
    %v543 = vsel %vm527, %v463, 0.0
    %v544 = vsel %vm528, %v465, 0.0
    %v545 = vsel %vm529, %v467, 0.0
    %v546 = vsel %vm530, %v469, 0.0
    %v547 = vsel %vm531, %v471, 0.0
    %v548 = vsel %vm532, %v473, 0.0
    %v549 = vsel %vm533, %v475, 0.0
    %v550 = vsel %vm534, %v477, 0.0
    %v551 = vsel %vm535, %v479, 0.0
    %v552 = vsel %vm536, %v481, 0.0
    %v553 = vsel %vm537, %v483, 0.0
    %v554 = vsel %vm538, %v485, 0.0
    %v555 = vsel %vm539, %v487, 0.0
    %v556 = vsel %vm540, %v489, 0.0
    %v557 = vadd.f32 %v541, %v542
    %v558 = vadd.f32 %v557, %v543
    %v559 = vadd.f32 %v558, %v544
    %v560 = vadd.f32 %v559, %v545
    %v561 = vadd.f32 %v560, %v546
    %v562 = vadd.f32 %v561, %v547
    %v563 = vadd.f32 %v562, %v548
    %v564 = vadd.f32 %v563, %v549
    %v565 = vadd.f32 %v564, %v550
    %v566 = vadd.f32 %v565, %v551
    %v567 = vadd.f32 %v566, %v552
    %v568 = vadd.f32 %v567, %v553
    %v569 = vadd.f32 %v568, %v554
    %v570 = vadd.f32 %v569, %v555
    %v571 = vadd.f32 %v570, %v556
    %v572 = vrot.slane %v571, 4
    %v573 = vadd.f32 %v571, %v572
    %v574 = vrot.slane %v573, 2
    %v575 = vadd.f32 %v573, %v574
    %v576 = vrot.slane %v575, 1
    %v577 = vadd.f32 %v575, %v576
    %578 = vst [vmem:[#allocation6] sm:$0x1] %v577
    // Predicated region
    $region18: #{tpu_custom_call.1} parent=1 // pred_check
      _
    $region19: #{tpu_custom_call.1} parent=1 // pred_check_branch
      %580 = sbr.rel (0) target = $region21
    $region20: #{tpu_custom_call.1} parent=1 // pred_region
      %s582 = ssub.s32 16, 16
      %583 = vsyncadd [#allocation5], %s582
      %s585 = sshll.u32 [#allocation6], 4
      %s586 = int_to_ptr.vmem [resolvable:$true] %s585
      %588 = dma.vmem_to_hbm [thread:$0]  %s586, 16, %s3, [#allocation5]
    $region21: #{tpu_custom_call.1} parent=1 // pred_fallthru
      _
    // Predicated region
    $region22: #{tpu_custom_call.1} parent=1 // pred_check
      _
    $region23: #{tpu_custom_call.1} parent=1 // pred_check_branch
      %590 = sbr.rel (0) target = $region25
    $region24: #{tpu_custom_call.1} parent=1 // pred_region
      %591 = dma.done [#allocation5], 16
    $region25: #{tpu_custom_call.1} parent=1 // pred_fallthru
      _
    %592 = vsyncpa [#allocation4], 1
    %593 = vsyncpa [#allocation5], 1

</llo_original>
